<compile_context>
chip_gen: v5e
topology: v5e:2x2
jax: 0.10.0
libtpu: 0.0.40
codegen_flags: <defaults>
</compile_context>

<pallas_src>
import jax
import jax.numpy as jnp
from jax import lax
from jax.experimental import pallas as pl
from jax.experimental.pallas import tpu as pltpu


def recons_kernel(w_ref, b_ref, label_ref, real_ref, sel_ref,
                  fake_ref, d0_ref, scal_ref):
    """One D-tile of the fused generator + loss-partials kernel.

    w_ref:     SMEM (C,)           channel-mixing weights (generator stand-in)
    b_ref:     SMEM (1,)           bias
    label_ref: VMEM (C, tD, H*W)   label block (lane-dense flattened spatial)
    real_ref:  VMEM (tD, H*W)      real block
    sel_ref:   VMEM (H*W, W+H)     selector: cols [0,W) -> mean over H, cols [W,W+H) -> mean over W
    fake_ref:  VMEM (tD, H*W)      generated block (output)
    d0_ref:    VMEM (1, 1, H*W)    per-tile sum over D of diff (axis-0 projection partial)
    scal_ref:  VMEM (1, 1, 128)    lane 0 = recons partial, lane 1 = axis1+axis2 proj partial
    """
    C = label_ref.shape[0]

    # Generator stand-in: fake = sum_c w[c] * label[c] + b  (bias folded at the end).
    # TODO(synk): for large C, replace this unrolled VPU loop with an MXU contraction;
    # unnecessary at C=4.
    acc = w_ref[0] * label_ref[0]
    for c in range(1, C):              # static, small unrolled loop over channels
        acc = acc + w_ref[c] * label_ref[c]
    fake = acc + b_ref[0]
    fake_ref[...] = fake

    # Single diff tensor feeds every loss term (mean is linear).
    diff = fake - real_ref[...]                                          # (tD, HW)

    # Reconstruction partial.
    pr = jnp.sum(diff * diff)

    # Axis-1 / axis-2 mean projections via one small MXU matmul (MXU is otherwise idle).
    # Each D-row's mean over H (and over W) is complete within this tile, so
    # squaring per-tile here is exact.
    m12 = jnp.dot(diff, sel_ref[...], preferred_element_type=jnp.float32)  # (tD, W+H)
    pp = jnp.sum(m12 * m12)

    # Axis-0 projection partial: sum over this tile's D slab. Accumulated across
    # tiles and only squared in the wrapper (per-tile squaring would be wrong).
    hw = d0_ref.shape[-1]
    d0_ref[...] = jnp.sum(diff, axis=0, keepdims=True).reshape(1, 1, hw)

    # Pack the two scalar partials into a lane-dense (1,1,128) row.
    lane = lax.broadcasted_iota(jnp.int32, (1, 1, 128), 2)
    scal_ref[...] = jnp.where(lane == 0, pr, jnp.where(lane == 1, pp, 0.0))


def _pick_tile_d(D, C, HW, budget_bytes=4 * 1024 * 1024):
    """Largest multiple-of-8 divisor of D whose double-buffered per-tile VMEM
    footprint stays under `budget_bytes`. Falls back to D when D % 8 != 0."""
    if D % 8 != 0:
        return D                       # TODO(synk): pad/mask for D not divisible by 8
    bytes_per_row = (C + 2) * HW * 4 * 2   # label + real + fake, x2 for double buffering
    best = 8
    t = 8
    while t <= D:
        if D % t == 0 and t * bytes_per_row <= budget_bytes:
            best = t
        t += 8
    return best


@jax.jit
def recons_forward(input_label, real_image, w, b):
    """Mirror of ReconsModel.forward.

    input_label: (1, C, D, H, W) float32
    real_image:  (1, 1, D, H, W) float32
    Returns [[loss_Recons, loss_Proj], fake_image] with fake_image (D, H, W).
    """
    _, C, D, H, W = input_label.shape
    HW = H * W
    # TODO(synk): if H*W is not a multiple of 128, pad the flattened spatial axis.

    label = input_label.reshape(C, D, HW).astype(jnp.float32)   # free contiguous reshape
    real = real_image.reshape(D, HW).astype(jnp.float32)
    w = w.astype(jnp.float32)
    b = b.astype(jnp.float32)

    tile_d = _pick_tile_d(D, C, HW)
    n_tiles = D // tile_d

    # Constant selector matrix: diff @ sel == [mean over H | mean over W] per D-row.
    flat = jnp.arange(HW)
    h_idx = flat // W
    w_idx = flat % W
    sel_h = (w_idx[:, None] == jnp.arange(W)[None, :]).astype(jnp.float32) / H   # (HW, W)
    sel_w = (h_idx[:, None] == jnp.arange(H)[None, :]).astype(jnp.float32) / W   # (HW, H)
    sel = jnp.concatenate([sel_h, sel_w], axis=1)                                # (HW, W+H)

    fake2d, d0_part, scal_part = pl.pallas_call(
        recons_kernel,
        out_shape=(
            jax.ShapeDtypeStruct((D, HW), jnp.float32),            # fake volume (lane-dense)
            jax.ShapeDtypeStruct((n_tiles, 1, HW), jnp.float32),   # per-tile axis-0 partial sums
            jax.ShapeDtypeStruct((n_tiles, 1, 128), jnp.float32),  # per-tile scalar partials
        ),
        grid_spec=pltpu.PrefetchScalarGridSpec(
            num_scalar_prefetch=0,
            grid=(n_tiles,),
            in_specs=[
                pl.BlockSpec(memory_space=pltpu.MemorySpace.SMEM),        # w
                pl.BlockSpec(memory_space=pltpu.MemorySpace.SMEM),        # b
                pl.BlockSpec((C, tile_d, HW), lambda i: (0, i, 0)),       # label tile
                pl.BlockSpec((tile_d, HW), lambda i: (i, 0)),             # real tile
                pl.BlockSpec((HW, W + H), lambda i: (0, 0)),              # selector (revisited)
            ],
            out_specs=(
                pl.BlockSpec((tile_d, HW), lambda i: (i, 0)),             # fake tile
                pl.BlockSpec((1, 1, HW), lambda i: (i, 0, 0)),            # d0 partial
                pl.BlockSpec((1, 1, 128), lambda i: (i, 0, 0)),           # scalar partials
            ),
        ),
        compiler_params=pltpu.CompilerParams(
            dimension_semantics=("parallel",),        # no carried accumulator -> megacore-friendly
            vmem_limit_bytes=32 * 1024 * 1024,        # raise v5e's 16 MiB scoped default
        ),
    )(w, b, label, real, sel)

    # Finalize losses from per-tile partials (tiny reductions, done by XLA).
    loss_recons = jnp.sum(scal_part[:, 0, 0])
    proj12 = jnp.sum(scal_part[:, 0, 1])
    d0 = jnp.sum(d0_part[:, 0, :], axis=0) / D        # accumulate over D BEFORE squaring
    loss_proj = jnp.sum(d0 * d0) + proj12

    fake = fake2d.reshape(D, H, W)
    return [[loss_recons, loss_proj], fake]


def _reference(input_label, real_image, w, b):
    """Pure-JAX reference for verification."""
    label = input_label[0].astype(jnp.float32)
    real = real_image[0, 0].astype(jnp.float32)
    fake = jnp.tensordot(w, label, axes=([0], [0])) + b[0]
    loss_recons = jnp.sum((fake - real) ** 2)
    loss_proj = (
        jnp.sum((jnp.mean(fake, 0) - jnp.mean(real, 0)) ** 2)
        + jnp.sum((jnp.mean(fake, 1) - jnp.mean(real, 1)) ** 2)
        + jnp.sum((jnp.mean(fake, 2) - jnp.mean(real, 2)) ** 2)
    )
    return loss_recons, loss_proj, fake


if __name__ == "__main__":
    key = jax.random.PRNGKey(0)
    k1, k2, k3, k4 = jax.random.split(key, 4)

    C, D, H, W = 4, 16, 16, 16
    input_label = jax.random.normal(k1, (1, C, D, H, W), dtype=jnp.float32)
    real_image = jax.random.normal(k2, (1, 1, D, H, W), dtype=jnp.float32)

    # deterministic "generator" parameters (synthetic 1x1x1 conv C->1)
    w = jax.random.normal(k3, (C,), dtype=jnp.float32) * 0.5
    b = jax.random.normal(k4, (1,), dtype=jnp.float32) * 0.1

    losses, fake = recons_forward(input_label, real_image, w, b)
    loss_recons, loss_proj = losses
    jax.block_until_ready((loss_recons, loss_proj, fake))

    ref_recons, ref_proj, ref_fake = _reference(input_label, real_image, w, b)
    assert jnp.allclose(fake, ref_fake, atol=1e-4, rtol=1e-4)
    assert jnp.allclose(loss_recons, ref_recons, atol=1e-2, rtol=1e-3)
    assert jnp.allclose(loss_proj, ref_proj, atol=1e-2, rtol=1e-3)

    print("KERNEL_OK")
</pallas_src>

<mosaic_0001>
module attributes {stable_mosaic.version = 11 : i64} {
  func.func @recons_kernel(%arg0: i32, %arg1: memref<4xf32, #tpu.memory_space<smem>>, %arg2: memref<1xf32, #tpu.memory_space<smem>>, %arg3: memref<4x16x256xf32, #tpu.memory_space<vmem>>, %arg4: memref<16x256xf32, #tpu.memory_space<vmem>>, %arg5: memref<256x32xf32, #tpu.memory_space<vmem>>, %arg6: memref<16x256xf32, #tpu.memory_space<vmem>>, %arg7: memref<1x1x256xf32, #tpu.memory_space<vmem>>, %arg8: memref<1x1x128xf32, #tpu.memory_space<vmem>>) attributes {dimension_semantics = [#tpu.dimension_semantics<parallel>], iteration_bounds = array<i64: 1>, scalar_prefetch = 0 : i64, scratch_operands = 0 : i64, tpu.core_type = #tpu.core_type<tc>, window_params = [{transform_indices = @transform_0, window_bounds = array<i64: 4>}, {transform_indices = @transform_1, window_bounds = array<i64: 1>}, {transform_indices = @transform_2, window_bounds = array<i64: 4, 16, 256>}, {transform_indices = @transform_3, window_bounds = array<i64: 16, 256>}, {pipeline_mode = #tpu.pipeline_mode<synchronous>, transform_indices = @transform_4, window_bounds = array<i64: 256, 32>}, {transform_indices = @transform_5, window_bounds = array<i64: 16, 256>}, {transform_indices = @transform_6, window_bounds = array<i64: 1, 1, 256>}, {transform_indices = @transform_7, window_bounds = array<i64: 1, 1, 128>}]} {
    %c0 = arith.constant 0 : index
    %0 = memref.load %arg1[%c0] : memref<4xf32, #tpu.memory_space<smem>>
    %c0_0 = arith.constant 0 : index
    %c0_1 = arith.constant 0 : index
    %c0_2 = arith.constant 0 : index
    %1 = vector.load %arg3[%c0_0, %c0_1, %c0_2] : memref<4x16x256xf32, #tpu.memory_space<vmem>>, vector<1x16x256xf32>
    %2 = vector.shape_cast %1 : vector<1x16x256xf32> to vector<16x256xf32>
    %3 = vector.broadcast %0 : f32 to vector<16x256xf32>
    %4 = arith.mulf %3, %2 : vector<16x256xf32>
    %c1 = arith.constant 1 : index
    %5 = memref.load %arg1[%c1] : memref<4xf32, #tpu.memory_space<smem>>
    %c1_3 = arith.constant 1 : index
    %c0_4 = arith.constant 0 : index
    %c0_5 = arith.constant 0 : index
    %6 = vector.load %arg3[%c1_3, %c0_4, %c0_5] : memref<4x16x256xf32, #tpu.memory_space<vmem>>, vector<1x16x256xf32>
    %7 = vector.shape_cast %6 : vector<1x16x256xf32> to vector<16x256xf32>
    %8 = vector.broadcast %5 : f32 to vector<16x256xf32>
    %9 = arith.mulf %8, %7 : vector<16x256xf32>
    %10 = arith.addf %4, %9 : vector<16x256xf32>
    %c2 = arith.constant 2 : index
    %11 = memref.load %arg1[%c2] : memref<4xf32, #tpu.memory_space<smem>>
    %c2_6 = arith.constant 2 : index
    %c0_7 = arith.constant 0 : index
    %c0_8 = arith.constant 0 : index
    %12 = vector.load %arg3[%c2_6, %c0_7, %c0_8] : memref<4x16x256xf32, #tpu.memory_space<vmem>>, vector<1x16x256xf32>
    %13 = vector.shape_cast %12 : vector<1x16x256xf32> to vector<16x256xf32>
    %14 = vector.broadcast %11 : f32 to vector<16x256xf32>
    %15 = arith.mulf %14, %13 : vector<16x256xf32>
    %16 = arith.addf %10, %15 : vector<16x256xf32>
    %c3 = arith.constant 3 : index
    %17 = memref.load %arg1[%c3] : memref<4xf32, #tpu.memory_space<smem>>
    %c3_9 = arith.constant 3 : index
    %c0_10 = arith.constant 0 : index
    %c0_11 = arith.constant 0 : index
    %18 = vector.load %arg3[%c3_9, %c0_10, %c0_11] : memref<4x16x256xf32, #tpu.memory_space<vmem>>, vector<1x16x256xf32>
    %19 = vector.shape_cast %18 : vector<1x16x256xf32> to vector<16x256xf32>
    %20 = vector.broadcast %17 : f32 to vector<16x256xf32>
    %21 = arith.mulf %20, %19 : vector<16x256xf32>
    %22 = arith.addf %16, %21 : vector<16x256xf32>
    %c0_12 = arith.constant 0 : index
    %23 = memref.load %arg2[%c0_12] : memref<1xf32, #tpu.memory_space<smem>>
    %24 = vector.broadcast %23 : f32 to vector<16x256xf32>
    %25 = arith.addf %22, %24 : vector<16x256xf32>
    %c0_13 = arith.constant 0 : index
    %c0_14 = arith.constant 0 : index
    %26 = vector.load %arg6[%c0_13, %c0_14] : memref<16x256xf32, #tpu.memory_space<vmem>>, vector<16x256xf32>
    tpu.vector_store %arg6[%c0_13, %c0_14], %25 {strides = array<i32>} : memref<16x256xf32, #tpu.memory_space<vmem>>, vector<16x256xf32>,
    %c0_15 = arith.constant 0 : index
    %c0_16 = arith.constant 0 : index
    %27 = vector.load %arg4[%c0_15, %c0_16] : memref<16x256xf32, #tpu.memory_space<vmem>>, vector<16x256xf32>
    %28 = arith.subf %25, %27 : vector<16x256xf32>
    %29 = arith.mulf %28, %28 : vector<16x256xf32>
    %30 = vector.shape_cast %29 : vector<16x256xf32> to vector<1x16x256xf32>
    %cst = arith.constant dense<0.000000e+00> : vector<1xf32>
    %31 = vector.multi_reduction <add>, %30, %cst [1, 2] : vector<1x16x256xf32> to vector<1xf32>
    %32 = vector.shape_cast %31 : vector<1xf32> to vector<1x1x1xf32>
    %33 = vector.extract %32[0, 0, 0] : f32 from vector<1x1x1xf32>
    %c0_17 = arith.constant 0 : index
    %c0_18 = arith.constant 0 : index
    %34 = vector.load %arg5[%c0_17, %c0_18] : memref<256x32xf32, #tpu.memory_space<vmem>>, vector<256x32xf32>
    %cst_19 = arith.constant dense<0.000000e+00> : vector<16x32xf32>
    %35 = tpu.matmul %28, %34, %cst_19 {dimension_numbers = #tpu.dot_dimension_numbers<[1], [0], [0], [1], [0, 0, 1, 1], [], []>} : vector<16x256xf32>, vector<256x32xf32>, vector<16x32xf32> -> vector<16x32xf32>
    %36 = arith.mulf %35, %35 : vector<16x32xf32>
    %37 = vector.shape_cast %36 : vector<16x32xf32> to vector<1x16x32xf32>
    %cst_20 = arith.constant dense<0.000000e+00> : vector<1xf32>
    %38 = vector.multi_reduction <add>, %37, %cst_20 [1, 2] : vector<1x16x32xf32> to vector<1xf32>
    %39 = vector.shape_cast %38 : vector<1xf32> to vector<1x1x1xf32>
    %40 = vector.extract %39[0, 0, 0] : f32 from vector<1x1x1xf32>
    %cst_21 = arith.constant dense<0.000000e+00> : vector<256xf32>
    %41 = vector.multi_reduction <add>, %28, %cst_21 [0] : vector<16x256xf32> to vector<256xf32>
    %42 = vector.shape_cast %41 : vector<256xf32> to vector<1x256xf32>
    %43 = vector.shape_cast %42 : vector<1x256xf32> to vector<1x1x256xf32>
    %c0_22 = arith.constant 0 : index
    %c0_23 = arith.constant 0 : index
    %c0_24 = arith.constant 0 : index
    %44 = vector.load %arg7[%c0_22, %c0_23, %c0_24] : memref<1x1x256xf32, #tpu.memory_space<vmem>>, vector<1x1x256xf32>
    tpu.vector_store %arg7[%c0_22, %c0_23, %c0_24], %43 {strides = array<i32>} : memref<1x1x256xf32, #tpu.memory_space<vmem>>, vector<1x1x256xf32>,
    %45 = tpu.iota {dimensions = array<i32: 2>} : vector<1x1x128xi32>
    %c0_i32 = arith.constant 0 : i32
    %46 = vector.broadcast %c0_i32 : i32 to vector<1x1x128xi32>
    %47 = arith.cmpi eq, %45, %46 : vector<1x1x128xi32>
    %c1_i32 = arith.constant 1 : i32
    %48 = vector.broadcast %c1_i32 : i32 to vector<1x1x128xi32>
    %49 = arith.cmpi eq, %45, %48 : vector<1x1x128xi32>
    %cst_25 = arith.constant 0.000000e+00 : f32
    %50 = vector.broadcast %40 : f32 to vector<1x1x128xf32>
    %51 = vector.broadcast %cst_25 : f32 to vector<1x1x128xf32>
    %52 = arith.select %49, %50, %51 : vector<1x1x128xi1>, vector<1x1x128xf32>
    %53 = vector.broadcast %33 : f32 to vector<1x1x128xf32>
    %54 = arith.select %47, %53, %52 : vector<1x1x128xi1>, vector<1x1x128xf32>
    %c0_26 = arith.constant 0 : index
    %c0_27 = arith.constant 0 : index
    %c0_28 = arith.constant 0 : index
    %55 = vector.load %arg8[%c0_26, %c0_27, %c0_28] : memref<1x1x128xf32, #tpu.memory_space<vmem>>, vector<1x1x128xf32>
    tpu.vector_store %arg8[%c0_26, %c0_27, %c0_28], %54 {strides = array<i32>} : memref<1x1x128xf32, #tpu.memory_space<vmem>>, vector<1x1x128xf32>,
    return
  }
  func.func @transform_0(%arg0: i32) -> i32 {
    %c0_i32 = arith.constant 0 : i32
    %c0_i32_0 = arith.constant 0 : i32
    return %c0_i32 : i32
  }
  func.func @transform_1(%arg0: i32) -> i32 {
    %c0_i32 = arith.constant 0 : i32
    %c0_i32_0 = arith.constant 0 : i32
    return %c0_i32 : i32
  }
  func.func @transform_2(%arg0: i32) -> (i32, i32, i32) {
    %c0_i32 = arith.constant 0 : i32
    %c0_i32_0 = arith.constant 0 : i32
    %c0_i32_1 = arith.constant 0 : i32
    return %c0_i32, %arg0, %c0_i32_0 : i32, i32, i32
  }
  func.func @transform_3(%arg0: i32) -> (i32, i32) {
    %c0_i32 = arith.constant 0 : i32
    %c0_i32_0 = arith.constant 0 : i32
    return %arg0, %c0_i32 : i32, i32
  }
  func.func @transform_4(%arg0: i32) -> (i32, i32) {
    %c0_i32 = arith.constant 0 : i32
    %c0_i32_0 = arith.constant 0 : i32
    %c0_i32_1 = arith.constant 0 : i32
    return %c0_i32, %c0_i32_0 : i32, i32
  }
  func.func @transform_5(%arg0: i32) -> (i32, i32) {
    %c0_i32 = arith.constant 0 : i32
    %c0_i32_0 = arith.constant 0 : i32
    return %arg0, %c0_i32 : i32, i32
  }
  func.func @transform_6(%arg0: i32) -> (i32, i32, i32) {
    %c0_i32 = arith.constant 0 : i32
    %c0_i32_0 = arith.constant 0 : i32
    %c0_i32_1 = arith.constant 0 : i32
    return %arg0, %c0_i32, %c0_i32_0 : i32, i32, i32
  }
  func.func @transform_7(%arg0: i32) -> (i32, i32, i32) {
    %c0_i32 = arith.constant 0 : i32
    %c0_i32_0 = arith.constant 0 : i32
    %c0_i32_1 = arith.constant 0 : i32
    return %arg0, %c0_i32, %c0_i32_0 : i32, i32, i32
  }
}

</mosaic_0001>

<llo_original>
// kernel: recons_forward.1
$region0: #{recons_forward.1}
  #allocation0 [shape = 'u32[]', space=smem, size = 0x4, offset = 0x4, fixed_abs, tag = 'smem constant byte address 0x4 - core index']
  #allocation1 [shape = 'u32[72,128]{1,0:T(1,128)}', space=vmem, size = 0x9000, scoped, tag = 'internal scratch']
  #allocation2 [shape = 'f32[1]{0:T(128)S(6)}', space=smem, size = 0x200, scoped, tag = 'scoped memory for recons_forward.1']
  %s0 = inlined_call_operand.vmem [shape: f32[4], index: 0, kind: input, shape index: {}]
  %s1 = inlined_call_operand.<no memory space> [shape: f32[1], index: 1, kind: input, shape index: {}]
  %s2 = inlined_call_operand.vmem [shape: f32[4,16,256], index: 2, kind: input, shape index: {}]
  %s3 = inlined_call_operand.vmem [shape: f32[16,256], index: 3, kind: input, shape index: {}]
  %s4 = inlined_call_operand.vmem [shape: f32[256,32], index: 4, kind: input, shape index: {}]
  %s5 = inlined_call_operand.vmem [shape: f32[16,256], index: 5, kind: output, shape index: {0}]
  %s6 = inlined_call_operand.vmem [shape: f32[1,1,256], index: 6, kind: output, shape index: {1}]
  %s7 = inlined_call_operand.vmem [shape: f32[1,1,128], index: 7, kind: output, shape index: {2}]
  %8 = xla_tuple %s5, %s6, %s7
  %s9 = sld [smem:[#allocation0]]
  $region50: #{recons_forward.1} parent=0
    _
  %s11 = ssub.s32 1, %s9
  %s12 = scalar_select 0, %s11, %s9
  %13 = sst [smem:[#allocation2]] %s1
  $region1: #{recons_forward.1} parent=0
    #allocation3 [shape = 'u8[512]{0}', space=smem, size = 0x200, scoped, tag = 'input window, operand 0, single buffered']
    #allocation4 [shape = 's32[1]{0}', space=sflag, size = 0x4, scoped, tag = 'scoped memory for recons_forward.1']
    %14 = vsyncpa [#allocation4], 0
    // Predicated region
    $region2: #{recons_forward.1} parent=1 // pred_check
      _
    $region3: #{recons_forward.1} parent=1 // pred_check_branch
      %16 = sbr.rel (0) target = $region5
    $region4: #{recons_forward.1} parent=1 // pred_region
      %18 = vsyncadd [#allocation4], 0
      %s20 = sshll.u32 %s0, 4
      %s21 = int_to_ptr.vmem [resolvable:$true] %s20
      %23 = dma.vmem_to_smem %s21, 16, [#allocation3], [#allocation4]
    $region5: #{recons_forward.1} parent=1 // pred_fallthru
      _
    // Predicated region
    $region6: #{recons_forward.1} parent=1 // pred_check
      _
    $region7: #{recons_forward.1} parent=1 // pred_check_branch
      %25 = sbr.rel (0) target = $region9
    $region8: #{recons_forward.1} parent=1 // pred_region
      _
    $region9: #{recons_forward.1} parent=1 // pred_fallthru
      _
    // Predicated region
    $region10: #{recons_forward.1} parent=1 // pred_check
      _
    $region11: #{recons_forward.1} parent=1 // pred_check_branch
      %27 = sbr.rel (0) target = $region13
    $region12: #{recons_forward.1} parent=1 // pred_region
      _
    $region13: #{recons_forward.1} parent=1 // pred_fallthru
      _
    // Predicated region
    $region14: #{recons_forward.1} parent=1 // pred_check
      _
    $region15: #{recons_forward.1} parent=1 // pred_check_branch
      %29 = sbr.rel (0) target = $region17
    $region16: #{recons_forward.1} parent=1 // pred_region
      _
    $region17: #{recons_forward.1} parent=1 // pred_fallthru
      _
    // Predicated region
    $region18: #{recons_forward.1} parent=1 // pred_check
      _
    $region19: #{recons_forward.1} parent=1 // pred_check_branch
      %31 = sbr.rel (0) target = $region21
    $region20: #{recons_forward.1} parent=1 // pred_region
      _
    $region21: #{recons_forward.1} parent=1 // pred_fallthru
      _
    // Predicated region
    $region22: #{recons_forward.1} parent=1 // pred_check
      _
    $region23: #{recons_forward.1} parent=1 // pred_check_branch
      %33 = sbr.rel (0) target = $region25
    $region24: #{recons_forward.1} parent=1 // pred_region
      %35 = dma.done [#allocation4], 16
    $region25: #{recons_forward.1} parent=1 // pred_fallthru
      _
    %36 = sfence
    %s37 = sld [smem:[#allocation3]]
    %v38 = vld [vmem:[%s2] sm:$0xff]
    %v39 = vld [vmem:[%s2 + $0x8] sm:$0xff]
    %v40 = vld [vmem:[%s2 + $0x10] sm:$0xff]
    %v41 = vld [vmem:[%s2 + $0x18] sm:$0xff]
    %v42 = vstv %s37
    %v43 = vmul.f32 %v42, %v38
    %v44 = vmul.f32 %v42, %v39
    %v45 = vmul.f32 %v42, %v40
    %v46 = vmul.f32 %v42, %v41
    %s47 = sld [smem:[#allocation3 + $0x1]]
    %s48 = scalar_lea.vmem %s2, 32
    %v49 = vld [vmem:[%s48] sm:$0xff]
    %v50 = vld [vmem:[%s48 + $0x8] sm:$0xff]
    %v51 = vld [vmem:[%s48 + $0x10] sm:$0xff]
    %v52 = vld [vmem:[%s48 + $0x18] sm:$0xff]
    %v53 = vstv %s47
    %v54 = vmul.f32 %v53, %v49
    %v55 = vmul.f32 %v53, %v50
    %v56 = vmul.f32 %v53, %v51
    %v57 = vmul.f32 %v53, %v52
    %v58 = vadd.f32 %v43, %v54
    %v59 = vadd.f32 %v44, %v55
    %v60 = vadd.f32 %v45, %v56
    %v61 = vadd.f32 %v46, %v57
    %s62 = sld [smem:[#allocation3 + $0x2]]
    %s63 = scalar_lea.vmem %s2, 64
    %v64 = vld [vmem:[%s63] sm:$0xff]
    %v65 = vld [vmem:[%s63 + $0x8] sm:$0xff]
    %v66 = vld [vmem:[%s63 + $0x10] sm:$0xff]
    %v67 = vld [vmem:[%s63 + $0x18] sm:$0xff]
    %v68 = vstv %s62
    %v69 = vmul.f32 %v68, %v64
    %v70 = vmul.f32 %v68, %v65
    %v71 = vmul.f32 %v68, %v66
    %v72 = vmul.f32 %v68, %v67
    %v73 = vadd.f32 %v58, %v69
    %v74 = vadd.f32 %v59, %v70
    %v75 = vadd.f32 %v60, %v71
    %v76 = vadd.f32 %v61, %v72
    %s77 = sld [smem:[#allocation3 + $0x3]]
    %s78 = scalar_lea.vmem %s2, 96
    %v79 = vld [vmem:[%s78] sm:$0xff]
    %v80 = vld [vmem:[%s78 + $0x8] sm:$0xff]
    %v81 = vld [vmem:[%s78 + $0x10] sm:$0xff]
    %v82 = vld [vmem:[%s78 + $0x18] sm:$0xff]
    %v83 = vstv %s77
    %v84 = vmul.f32 %v83, %v79
    %v85 = vmul.f32 %v83, %v80
    %v86 = vmul.f32 %v83, %v81
    %v87 = vmul.f32 %v83, %v82
    %v88 = vadd.f32 %v73, %v84
    %v89 = vadd.f32 %v74, %v85
    %v90 = vadd.f32 %v75, %v86
    %v91 = vadd.f32 %v76, %v87
    %s92 = sld [smem:[#allocation2]]
    %v93 = vstv %s92
    %v94 = vadd.f32 %v88, %v93
    %v95 = vadd.f32 %v89, %v93
    %v96 = vadd.f32 %v90, %v93
    %v97 = vadd.f32 %v91, %v93
    %98 = vst [vmem:[%s5] sm:$0xff] %v94
    %99 = vst [vmem:[%s5 + $0x8] sm:$0xff] %v95
    %100 = vst [vmem:[%s5 + $0x10] sm:$0xff] %v96
    %101 = vst [vmem:[%s5 + $0x18] sm:$0xff] %v97
    %v102 = vld [vmem:[%s3] sm:$0xff]
    %v103 = vld [vmem:[%s3 + $0x8] sm:$0xff]
    %v104 = vld [vmem:[%s3 + $0x10] sm:$0xff]
    %v105 = vld [vmem:[%s3 + $0x18] sm:$0xff]
    %v106 = vsub.f32 %v94, %v102
    %v107 = vsub.f32 %v95, %v103
    %v108 = vsub.f32 %v96, %v104
    %v109 = vsub.f32 %v97, %v105
    %v110 = vmul.f32 %v106, %v106
    %v111 = vmul.f32 %v107, %v107
    %v112 = vmul.f32 %v108, %v108
    %v113 = vmul.f32 %v109, %v109
    %v114 = vadd.f32 %v110, %v111
    %v115 = vadd.f32 %v114, %v112
    %v116 = vadd.f32 %v115, %v113
    %117 = vadd.xlane.f32.xlu0 %v116
    %v118 = vpop.xlane.xlu0 %117
    %v119 = vrot.slane %v118, 4
    %v120 = vadd.f32 %v118, %v119
    %v121 = vrot.slane %v120, 2
    %v122 = vadd.f32 %v120, %v121
    %v123 = vrot.slane %v122, 1
    %v124 = vadd.f32 %v122, %v123
    %s125 = vtos %v124
    %v126 = vld [vmem:[%s4] sm:$0xff]
    %v127 = vld [vmem:[%s4 + $0x8] sm:$0xff]
    %v128 = vld [vmem:[%s4 + $0x10] sm:$0xff]
    %v129 = vld [vmem:[%s4 + $0x18] sm:$0xff]
    %v130 = vld [vmem:[%s4 + $0x20] sm:$0xff]
    %v131 = vld [vmem:[%s4 + $0x28] sm:$0xff]
    %v132 = vld [vmem:[%s4 + $0x30] sm:$0xff]
    %v133 = vld [vmem:[%s4 + $0x38] sm:$0xff]
    %v134 = vld [vmem:[%s4 + $0x40] sm:$0xff]
    %v135 = vld [vmem:[%s4 + $0x48] sm:$0xff]
    %v136 = vld [vmem:[%s4 + $0x50] sm:$0xff]
    %v137 = vld [vmem:[%s4 + $0x58] sm:$0xff]
    %v138 = vld [vmem:[%s4 + $0x60] sm:$0xff]
    %v139 = vld [vmem:[%s4 + $0x68] sm:$0xff]
    %v140 = vld [vmem:[%s4 + $0x70] sm:$0xff]
    %v141 = vld [vmem:[%s4 + $0x78] sm:$0xff]
    %v142 = vld [vmem:[%s4 + $0x80] sm:$0xff]
    %v143 = vld [vmem:[%s4 + $0x88] sm:$0xff]
    %v144 = vld [vmem:[%s4 + $0x90] sm:$0xff]
    %v145 = vld [vmem:[%s4 + $0x98] sm:$0xff]
    %v146 = vld [vmem:[%s4 + $0xa0] sm:$0xff]
    %v147 = vld [vmem:[%s4 + $0xa8] sm:$0xff]
    %v148 = vld [vmem:[%s4 + $0xb0] sm:$0xff]
    %v149 = vld [vmem:[%s4 + $0xb8] sm:$0xff]
    %v150 = vld [vmem:[%s4 + $0xc0] sm:$0xff]
    %v151 = vld [vmem:[%s4 + $0xc8] sm:$0xff]
    %v152 = vld [vmem:[%s4 + $0xd0] sm:$0xff]
    %v153 = vld [vmem:[%s4 + $0xd8] sm:$0xff]
    %v154 = vld [vmem:[%s4 + $0xe0] sm:$0xff]
    %v155 = vld [vmem:[%s4 + $0xe8] sm:$0xff]
    %v156 = vld [vmem:[%s4 + $0xf0] sm:$0xff]
    %v157 = vld [vmem:[%s4 + $0xf8] sm:$0xff]
    %158 = vmatpush.msra.mxu0 %v141
    %159 = vmatpush.msra.mxu0 %v140
    %160 = vmatpush.msra.mxu0 %v139
    %161 = vmatpush.msra.mxu0 %v138
    %162 = vmatpush.msra.mxu0 %v137
    %163 = vmatpush.msra.mxu0 %v136
    %164 = vmatpush.msra.mxu0 %v135
    %165 = vmatpush.msra.mxu0 %v134
    %166 = vmatpush.msra.mxu0 %v133
    %167 = vmatpush.msra.mxu0 %v132
    %168 = vmatpush.msra.mxu0 %v131
    %169 = vmatpush.msra.mxu0 %v130
    %170 = vmatpush.msra.mxu0 %v129
    %171 = vmatpush.msra.mxu0 %v128
    %172 = vmatpush.msra.mxu0 %v127
    %173 = vmatpush.msra.mxu0 %v126
    %174 = vmatmul.f32.gmra.mxu0 %v106
    %v175 = vpop.f32.mrf.mxu0
    %v176 = vadd.f32 0.0, %v175
    %177 = vmatmul.f32.gmra.mxu0 %v108
    %v178 = vpop.f32.mrf.mxu0
    %v179 = vadd.f32 0.0, %v178
    %180 = vdwg.mxu0
    %181 = vmatpush.msra.mxu0 %v157
    %182 = vmatpush.msra.mxu0 %v156
    %183 = vmatpush.msra.mxu0 %v155
    %184 = vmatpush.msra.mxu0 %v154
    %185 = vmatpush.msra.mxu0 %v153
    %186 = vmatpush.msra.mxu0 %v152
    %187 = vmatpush.msra.mxu0 %v151
    %188 = vmatpush.msra.mxu0 %v150
    %189 = vmatpush.msra.mxu0 %v149
    %190 = vmatpush.msra.mxu0 %v148
    %191 = vmatpush.msra.mxu0 %v147
    %192 = vmatpush.msra.mxu0 %v146
    %193 = vmatpush.msra.mxu0 %v145
    %194 = vmatpush.msra.mxu0 %v144
    %195 = vmatpush.msra.mxu0 %v143
    %196 = vmatpush.msra.mxu0 %v142
    %197 = vmatmul.f32.gmra.mxu0 %v107
    %v198 = vpop.f32.mrf.mxu0
    %v199 = vadd.f32 %v176, %v198
    %200 = vmatmul.f32.gmra.mxu0 %v109
    %v201 = vpop.f32.mrf.mxu0
    %v202 = vadd.f32 %v179, %v201
    %203 = vdwg.mxu0
    %v204 = vmul.f32 %v199, %v199
    %v205 = vmul.f32 %v202, %v202
    %vm206 = vcmask 261120
    %v207 = vsel %vm206, %v204, 0.0
    %v208 = vsel %vm206, %v205, 0.0
    %v209 = vadd.f32 %v207, %v208
    %210 = vadd.xlane.f32.xlu0 %v209
    %v211 = vpop.xlane.xlu0 %210
    %v212 = vrot.slane %v211, 4
    %v213 = vadd.f32 %v211, %v212
    %v214 = vrot.slane %v213, 2
    %v215 = vadd.f32 %v213, %v214
    %v216 = vrot.slane %v215, 1
    %v217 = vadd.f32 %v215, %v216
    %s218 = vtos %v217
    %v219 = vadd.f32 %v106, %v108
    %v220 = vrot.slane %v219, 4
    %v221 = vadd.f32 %v219, %v220
    %v222 = vrot.slane %v221, 2
    %v223 = vadd.f32 %v221, %v222
    %v224 = vrot.slane %v223, 1
    %v225 = vadd.f32 %v223, %v224
    %v226 = vadd.f32 %v107, %v109
    %v227 = vrot.slane %v226, 4
    %v228 = vadd.f32 %v226, %v227
    %v229 = vrot.slane %v228, 2
    %v230 = vadd.f32 %v228, %v229
    %v231 = vrot.slane %v230, 1
    %v232 = vadd.f32 %v230, %v231
    %v235 = vrot.slane %v232, 7
    %vm236 = vcmask 1040384
    %v237 = vsel %vm236, %v225, %v235
    %v239 = vlaneseq
    %vm240 = vcmp.ge.s32.totalorder %v239, 0
    %vm241 = vcmp.lt.s32.totalorder %v239, 256
    %vm242 = vmand %vm240, %vm241
    %243 = vst.msk [vmem:[%s6] sm:$0x3] %vm242, %v237
    %v244 = vlaneseq
    %v245 = vand.u32 %v244, 127
    %vm246 = vcmp.eq.s32.totalorder %v245, 0
    %vm247 = vcmp.eq.s32.totalorder %v245, 1
    %v248 = vstv %s218
    %v249 = vsel %vm247, %v248, 0.0
    %v250 = vstv %s125
    %v251 = vsel %vm246, %v250, %v249
    %252 = vst [vmem:[%s7] sm:$0x1] %v251
    // Predicated region
    $region26: #{recons_forward.1} parent=1 // pred_check
      _
    $region27: #{recons_forward.1} parent=1 // pred_check_branch
      %254 = sbr.rel (0) target = $region29
    $region28: #{recons_forward.1} parent=1 // pred_region
      _
    $region29: #{recons_forward.1} parent=1 // pred_fallthru
      _
    // Predicated region
    $region30: #{recons_forward.1} parent=1 // pred_check
      _
    $region31: #{recons_forward.1} parent=1 // pred_check_branch
      %256 = sbr.rel (0) target = $region33
    $region32: #{recons_forward.1} parent=1 // pred_region
      _
    $region33: #{recons_forward.1} parent=1 // pred_fallthru
      _
    // Predicated region
    $region34: #{recons_forward.1} parent=1 // pred_check
      _
    $region35: #{recons_forward.1} parent=1 // pred_check_branch
      %258 = sbr.rel (0) target = $region37
    $region36: #{recons_forward.1} parent=1 // pred_region
      _
    $region37: #{recons_forward.1} parent=1 // pred_fallthru
      _
    // Predicated region
    $region38: #{recons_forward.1} parent=1 // pred_check
      _
    $region39: #{recons_forward.1} parent=1 // pred_check_branch
      %260 = sbr.rel (0) target = $region41
    $region40: #{recons_forward.1} parent=1 // pred_region
      _
    $region41: #{recons_forward.1} parent=1 // pred_fallthru
      _
    // Predicated region
    $region42: #{recons_forward.1} parent=1 // pred_check
      _
    $region43: #{recons_forward.1} parent=1 // pred_check_branch
      %262 = sbr.rel (0) target = $region45
    $region44: #{recons_forward.1} parent=1 // pred_region
      _
    $region45: #{recons_forward.1} parent=1 // pred_fallthru
      _
    // Predicated region
    $region46: #{recons_forward.1} parent=1 // pred_check
      _
    $region47: #{recons_forward.1} parent=1 // pred_check_branch
      %264 = sbr.rel (0) target = $region49
    $region48: #{recons_forward.1} parent=1 // pred_region
      _
    $region49: #{recons_forward.1} parent=1 // pred_fallthru
      _
    %265 = vsyncpa [#allocation4], 1

</llo_original>
